<compile_context>
chip_gen: v7x
topology: tpu7x:2x2x1
jax: 0.10.0
libtpu: 0.0.40
codegen_flags: <defaults>
</compile_context>

<pallas_src>
import functools

import numpy as np
import jax
import jax.numpy as jnp
from jax import lax
from jax.experimental import pallas as pl
from jax.experimental.pallas import tpu as pltpu


def _round_up(v, m):
  return (v + m - 1) // m * m


def _vmem_limit_bytes():
  """Generation-aware scoped-VMEM budget (v7x: ~54 MiB, v5e/v6e: ~108 MiB)."""
  try:
    cap = int(pltpu.get_tpu_info().vmem_capacity_bytes)
  except Exception:
    cap = 64 * 1024 * 1024            # conservative fallback: v7x per-TC VMEM
  return max(32 * 1024 * 1024, min(int(cap * 0.85), cap - (8 << 20)))


def _pick_node_tile(n):
  for cand in (1024, 512, 256, 128, 64, 32, 16, 8):
    if n % cand == 0:
      return cand
  return n


def _pick_edge_tile(e, n, hd, hp, vmem_limit, requested):
  # Resident VMEM: bf16 qrot / kv inputs (double-buffered by the pipeline),
  # the f32 accumulator scratch and the resident f32 output block.
  resident = (n * hd * 2 + n * 2 * hd * 2) * 2 + n * (hd + hp) * 4 + n * hd * 4 * 2
  # Per edge-row [*, N] temporaries: int32 iota + two bf16 one-hot selectors
  # (+ slack for masks / intermediate copies).
  per_row = n * 12 + 64
  avail = max(vmem_limit - resident - (6 << 20), 2 << 20)
  te = min(int(requested), int(avail // per_row), _round_up(e, 8))
  return max(8, (te // 8) * 8)


# ----------------------------------------------------------------------------
# Kernel 1: fused projection + rotary rotation (node-tiled, "parallel").
#   One wide matmul [tn, IN] @ [IN, 5*HD] producing Q, Q@P, K, K@P, V, then the
#   rotation Q*cos + (Q@P)*sin (same for K).  Outputs in bf16 for the edge
#   kernel's MXU fast path.
# ----------------------------------------------------------------------------
def _project_rotate_kernel(x_ref, wf_ref, bf_ref, cos_ref, sin_ref,
                           qrot_ref, kv_ref, *, hd):
  HD = hd
  proj = jnp.dot(x_ref[...], wf_ref[...],
                 preferred_element_type=jnp.float32) + bf_ref[...]   # [tn, 5*HD]
  q, q2 = proj[:, 0:HD], proj[:, HD:2 * HD]
  k, k2 = proj[:, 2 * HD:3 * HD], proj[:, 3 * HD:4 * HD]
  v = proj[:, 4 * HD:5 * HD]
  c, s = cos_ref[...], sin_ref[...]
  qrot_ref[...] = (q * c + q2 * s).astype(qrot_ref.dtype)
  # Two slice stores (no materialized concat) into the [tn, 2*HD] output.
  kv_ref[:, 0:HD] = (k * c + k2 * s).astype(kv_ref.dtype)
  kv_ref[:, HD:2 * HD] = v.astype(kv_ref.dtype)


# ----------------------------------------------------------------------------
# Kernel 2: edge-tiled sparse attention (grid = (num_edge_tiles,), "arbitrary").
#   Per tile: bf16 one-hot gathers of Q[dst] and [K|V][src], per-edge scores,
#   clamp-shifted exp, and a single fused bf16 scatter of [weighted-V | weight]
#   into the resident [N, HD+Hp] accumulator.  Normalization at the last tile.
# ----------------------------------------------------------------------------
def _sparse_attention_kernel(
    edges_ref,    # [TE, 2] int32 : col 0 = src, col 1 = dst (padded dst = N)
    qrot_ref,     # [N, HD]   bf16 : rotated Q
    kv_ref,       # [N, 2*HD] bf16 : [rotated K | V]
    hsel_ref,     # [Hp, HD]  f32  : per-head block selector (0/1, zero pad rows)
    out_ref,      # [N, HD]   f32  : wV (flat)
    acc_ref,      # scratch [N, HD + Hp] f32 : [numerator | denominator]
    *, hd, hp, out_dim, clamp):
  f32 = jnp.float32
  bf16 = jnp.bfloat16
  HD = hd
  N = qrot_ref.shape[0]
  TE = edges_ref.shape[0]
  t = pl.program_id(0)

  dot = functools.partial(jnp.dot, preferred_element_type=f32)
  dgen = functools.partial(lax.dot_general, preferred_element_type=f32)

  @pl.when(t == 0)
  def _init():
    acc_ref[...] = jnp.zeros_like(acc_ref)

  # ---- bf16 one-hot selectors (padded edges: dst == N -> all-zero dst row).
  src = edges_ref[:, 0:1]
  dst = edges_ref[:, 1:2]
  iota_n = lax.broadcasted_iota(jnp.int32, (TE, N), 1)
  one = jnp.ones((), bf16)
  zero = jnp.zeros((), bf16)
  s_src = jnp.where(src == iota_n, one, zero)                   # [TE, N] bf16
  s_dst = jnp.where(dst == iota_n, one, zero)                   # [TE, N] bf16

  # ---- gathers as bf16 MXU contractions (f32 accumulation).
  qg = dot(s_dst, qrot_ref[...])                                # Q[dst]   [TE, HD]
  kvg = dot(s_src, kv_ref[...])                                 # [K|V][src] [TE, 2*HD]
  kg, vg = kvg[:, 0:HD], kvg[:, HD:2 * HD]

  # ---- per-edge per-head score, clamp-shifted softmax numerator.
  hsel = hsel_ref[...]                                          # [Hp, HD] f32
  score = dgen(kg * qg, hsel, (((1,), (1,)), ((), ()))) * (
      1.0 / float(out_dim) ** 0.5)                              # [TE, Hp]
  score = jnp.clip(score, -clamp, clamp)
  # Scores are clipped to +/-clamp, so exp(score - clamp) lies in (0, 1]; the
  # constant shift cancels in the num/den ratio (pyg_softmax semantics, no
  # per-node running max needed).  NOTE: dropout p = 0.0 here -> identity.
  ex = jnp.exp(score - clamp).astype(bf16)                      # [TE, Hp] bf16

  # ---- fused scatter: one [TE, HD+Hp] message, one [TE,N] MXU pass per tile.
  ex_edge = dot(ex, hsel.astype(bf16))                          # per-head bcast [TE, HD]
  msg = jnp.concatenate([(vg * ex_edge).astype(bf16), ex], axis=1)   # [TE, HD+Hp]
  acc_ref[...] += dgen(s_dst, msg, (((0,), (0,)), ((), ())))         # [N, HD+Hp]

  # ---- last tile: normalize.  wV = num / (den + eps)  (eps per pyg_softmax).
  @pl.when(t == pl.num_programs(0) - 1)
  def _finalize():
    num = acc_ref[:, 0:HD]                                      # [N, HD]
    den = acc_ref[:, HD:]                                       # [N, Hp]
    inv = pl.reciprocal(den + 1e-16, approx=False)              # exact, runs once
    out_ref[...] = num * dot(inv, hsel)                         # [N, HD]


# ----------------------------------------------------------------------------
# Wrapper: weight fusion, cos/sin expansion, edge packing, pallas_call specs.
# ----------------------------------------------------------------------------
def multihead_sparse_attention(x, angles, edge_index, params,
                               *, num_heads, out_dim, clamp=5.0,
                               edge_tile=1024):
  N, in_dim = x.shape
  E = edge_index.shape[1]
  H, D = num_heads, out_dim
  HD = H * D
  Hp = max(8, _round_up(H, 8))
  assert D % 2 == 0 and angles.shape == (N, HD // 2)
  assert clamp is not None, "this kernel requires a finite clamp (module default 5.0)"
  clamp = abs(float(clamp))
  # exp(-2*clamp) must stay comfortably inside the f32 normal range for the
  # shift-softmax trick (see kernel comment).
  assert clamp <= 30.0, "clamp too large for the exp(score - clamp) softmax shift"

  wq, bq, wk, bk, wv, bv = params

  # Signed permutation P with q2_flat = q_flat @ P (exactly the PyTorch
  # stack([-Q[...,1::2], Q[...,::2]], dim=2).reshape layout), folded into the
  # projection weights so q2/k2 come straight out of the fused matmul.
  pmat = np.zeros((HD, HD), np.float32)
  for h in range(H):
    for j in range(D // 2):
      pmat[h * D + 2 * j + 1, h * D + j] = -1.0
      pmat[h * D + 2 * j, h * D + D // 2 + j] = 1.0
  pmat = jnp.asarray(pmat)

  wf = jnp.concatenate([wq, wq @ pmat, wk, wk @ pmat, wv], axis=1)   # [IN, 5*HD]
  bf = jnp.concatenate([bq, bq @ pmat, bk, bk @ pmat, bv], axis=1)   # [1, 5*HD]

  # Per-head block selector, padded to Hp rows (pad rows all-zero -> inert).
  hsel = np.zeros((Hp, HD), np.float32)
  for h in range(H):
    hsel[h, h * D:(h + 1) * D] = 1.0
  hsel = jnp.asarray(hsel)

  # cos/sin already in the repeat_interleave(2) layout (cheap XLA glue).
  theta = jnp.repeat(angles, 2, axis=1)                              # [N, HD]
  cosv = jnp.cos(theta).astype(jnp.float32)
  sinv = jnp.sin(theta).astype(jnp.float32)

  vmem_limit = _vmem_limit_bytes()

  # ---- kernel 1: projection + rotation -> bf16 qrot [N,HD], kv [N,2*HD].
  tn = _pick_node_tile(N)
  proj_grid = pltpu.PrefetchScalarGridSpec(
      num_scalar_prefetch=0,
      grid=(N // tn,),
      in_specs=[
          pl.BlockSpec((tn, in_dim), lambda i: (i, 0)),
          pl.BlockSpec((in_dim, 5 * HD), lambda i: (0, 0)),
          pl.BlockSpec((1, 5 * HD), lambda i: (0, 0)),
          pl.BlockSpec((tn, HD), lambda i: (i, 0)),
          pl.BlockSpec((tn, HD), lambda i: (i, 0)),
      ],
      out_specs=[
          pl.BlockSpec((tn, HD), lambda i: (i, 0)),
          pl.BlockSpec((tn, 2 * HD), lambda i: (i, 0)),
      ],
  )
  qrot, kv = pl.pallas_call(
      functools.partial(_project_rotate_kernel, hd=HD),
      out_shape=(jax.ShapeDtypeStruct((N, HD), jnp.bfloat16),
                 jax.ShapeDtypeStruct((N, 2 * HD), jnp.bfloat16)),
      grid_spec=proj_grid,
      compiler_params=pltpu.CompilerParams(
          dimension_semantics=("parallel",),
          vmem_limit_bytes=vmem_limit),
  )(x, wf, bf, cosv, sinv)

  # ---- edge packing: one [E_pad, 2] int32 array; padded edges get dst = N
  #      (out of range) so their one-hot scatter rows are all-zero.
  TE = _pick_edge_tile(E, N, HD, Hp, vmem_limit, edge_tile)
  E_pad = _round_up(E, TE)
  src = edge_index[0].astype(jnp.int32)
  dst = edge_index[1].astype(jnp.int32)
  if E_pad != E:
    pad = E_pad - E
    src = jnp.concatenate([src, jnp.zeros((pad,), jnp.int32)])
    dst = jnp.concatenate([dst, jnp.full((pad,), N, jnp.int32)])
  edges = jnp.stack([src, dst], axis=1)                              # [E_pad, 2]
  n_tiles = E_pad // TE

  # ---- kernel 2: edge-tiled attention with resident accumulator.
  kernel = functools.partial(_sparse_attention_kernel,
                             hd=HD, hp=Hp, out_dim=D, clamp=clamp)
  grid_spec = pltpu.PrefetchScalarGridSpec(
      num_scalar_prefetch=0,
      grid=(n_tiles,),
      in_specs=[
          pl.BlockSpec((TE, 2), lambda t: (t, 0)),      # packed src/dst tile
          pl.BlockSpec((N, HD), lambda t: (0, 0)),      # qrot (grid-invariant)
          pl.BlockSpec((N, 2 * HD), lambda t: (0, 0)),  # [K|V] (grid-invariant)
          pl.BlockSpec((Hp, HD), lambda t: (0, 0)),     # head selector
      ],
      out_specs=pl.BlockSpec((N, HD), lambda t: (0, 0)),
      scratch_shapes=[
          pltpu.VMEM((N, HD + Hp), jnp.float32),        # [numerator | denominator]
      ],
  )
  wv_flat = pl.pallas_call(
      kernel,
      out_shape=jax.ShapeDtypeStruct((N, HD), jnp.float32),
      grid_spec=grid_spec,
      compiler_params=pltpu.CompilerParams(
          dimension_semantics=("arbitrary",),           # edge axis carries accumulator
          vmem_limit_bytes=vmem_limit),
  )(edges, qrot, kv, hsel)

  return wv_flat.reshape(N, H, D)


# ----------------------------------------------------------------------------
# Deterministic parameter init (mirrors nn.Linear + xavier_normal_ shapes)
# ----------------------------------------------------------------------------
def init_params(key, in_dim, num_heads, out_dim):
  HD = num_heads * out_dim
  std = float(np.sqrt(2.0 / (in_dim + HD)))      # xavier normal
  bound = 1.0 / float(np.sqrt(in_dim))           # default nn.Linear bias init
  ks = jax.random.split(key, 6)
  wq = std * jax.random.normal(ks[0], (in_dim, HD), jnp.float32)
  wk = std * jax.random.normal(ks[1], (in_dim, HD), jnp.float32)
  wv = std * jax.random.normal(ks[2], (in_dim, HD), jnp.float32)
  bq = jax.random.uniform(ks[3], (1, HD), jnp.float32, -bound, bound)
  bk = jax.random.uniform(ks[4], (1, HD), jnp.float32, -bound, bound)
  bv = jax.random.uniform(ks[5], (1, HD), jnp.float32, -bound, bound)
  return (wq, bq, wk, bk, wv, bv)


# ----------------------------------------------------------------------------
# Pure-JAX reference (direct transcription of the PyTorch forward)
# ----------------------------------------------------------------------------
def reference_forward(x, angles, edge_index, params, *, num_heads, out_dim,
                      clamp=5.0):
  wq, bq, wk, bk, wv, bv = params
  N = x.shape[0]
  H, D = num_heads, out_dim
  Q = (x @ wq + bq).reshape(N, H, D)
  K = (x @ wk + bk).reshape(N, H, D)
  V = (x @ wv + bv).reshape(N, H, D)
  theta = jnp.repeat(angles, 2, axis=1).reshape(N, H, D)
  cosv, sinv = jnp.cos(theta), jnp.sin(theta)
  q2 = jnp.stack([-Q[..., 1::2], Q[..., ::2]], axis=2).reshape(Q.shape)
  k2 = jnp.stack([-K[..., 1::2], K[..., ::2]], axis=2).reshape(K.shape)
  Q = Q * cosv + q2 * sinv
  K = K * cosv + k2 * sinv
  src, dst = edge_index[0], edge_index[1]
  score = jnp.sum(K[src] * Q[dst], axis=2) / np.sqrt(D)          # [E, H]
  score = jnp.clip(score, -abs(clamp), abs(clamp))
  m = jax.ops.segment_max(score, dst, num_segments=N)
  ex = jnp.exp(score - m[dst])
  den = jax.ops.segment_sum(ex, dst, num_segments=N)
  attn = ex / (den[dst] + 1e-16)
  msg = V[src] * attn[:, :, None]
  wV = jax.ops.segment_sum(msg, dst, num_segments=N)
  return wV


if __name__ == "__main__":
  key = jax.random.PRNGKey(0)
  N, in_dim, H, D, E = 16, 32, 4, 8, 48    # nodes, in_dim, heads, out_dim, edges

  k_x, k_ang, k_e, k_p = jax.random.split(key, 4)
  x = jax.random.normal(k_x, (N, in_dim), jnp.float32)
  angles = jax.random.normal(k_ang, (N, H * D // 2), jnp.float32)
  edge_index = jax.random.randint(k_e, (2, E), 0, N, dtype=jnp.int32)
  params = init_params(k_p, in_dim, H, D)

  out = multihead_sparse_attention(x, angles, edge_index, params,
                                   num_heads=H, out_dim=D, clamp=5.0)
  out = jax.block_until_ready(out)

  ref = reference_forward(x, angles, edge_index, params,
                          num_heads=H, out_dim=D, clamp=5.0)
  # bf16 MXU path inside the kernel (f32 accumulation) -> ~1e-2-level relative
  # agreement with the all-f32 reference is expected.
  np.testing.assert_allclose(np.asarray(out), np.asarray(ref),
                             rtol=3e-2, atol=3e-2)
  print("KERNEL_OK")
</pallas_src>

<mosaic_0001>
module attributes {stable_mosaic.version = 11 : i64} {
  func.func @_project_rotate_kernel(%arg0: i32, %arg1: memref<16x32xf32, #tpu.memory_space<vmem>>, %arg2: memref<32x160xf32, #tpu.memory_space<vmem>>, %arg3: memref<1x160xf32, #tpu.memory_space<vmem>>, %arg4: memref<16x32xf32, #tpu.memory_space<vmem>>, %arg5: memref<16x32xf32, #tpu.memory_space<vmem>>, %arg6: memref<16x32xbf16, #tpu.memory_space<vmem>>, %arg7: memref<16x64xbf16, #tpu.memory_space<vmem>>) attributes {dimension_semantics = [#tpu.dimension_semantics<parallel>], iteration_bounds = array<i64: 1>, scalar_prefetch = 0 : i64, scratch_operands = 0 : i64, tpu.core_type = #tpu.core_type<tc>, window_params = [{transform_indices = @transform_0, window_bounds = array<i64: 16, 32>}, {pipeline_mode = #tpu.pipeline_mode<synchronous>, transform_indices = @transform_1, window_bounds = array<i64: 32, 160>}, {pipeline_mode = #tpu.pipeline_mode<synchronous>, transform_indices = @transform_2, window_bounds = array<i64: 1, 160>}, {transform_indices = @transform_3, window_bounds = array<i64: 16, 32>}, {transform_indices = @transform_4, window_bounds = array<i64: 16, 32>}, {transform_indices = @transform_5, window_bounds = array<i64: 16, 32>}, {transform_indices = @transform_6, window_bounds = array<i64: 16, 64>}]} {
    %c0 = arith.constant 0 : index
    %c0_0 = arith.constant 0 : index
    %0 = vector.load %arg1[%c0, %c0_0] : memref<16x32xf32, #tpu.memory_space<vmem>>, vector<16x32xf32>
    %c0_1 = arith.constant 0 : index
    %c0_2 = arith.constant 0 : index
    %1 = vector.load %arg2[%c0_1, %c0_2] : memref<32x160xf32, #tpu.memory_space<vmem>>, vector<32x160xf32>
    %cst = arith.constant dense<0.000000e+00> : vector<16x160xf32>
    %2 = tpu.matmul %0, %1, %cst {dimension_numbers = #tpu.dot_dimension_numbers<[1], [0], [0], [1], [0, 0, 1, 1], [], []>} : vector<16x32xf32>, vector<32x160xf32>, vector<16x160xf32> -> vector<16x160xf32>
    %c0_3 = arith.constant 0 : index
    %c0_4 = arith.constant 0 : index
    %3 = vector.load %arg3[%c0_3, %c0_4] : memref<1x160xf32, #tpu.memory_space<vmem>>, vector<1x160xf32>
    %4 = vector.broadcast %3 : vector<1x160xf32> to vector<16x160xf32>
    %5 = arith.addf %2, %4 : vector<16x160xf32>
    %6 = vector.extract_strided_slice %5 {offsets = [0, 0], sizes = [16, 32], strides = [1, 1]} : vector<16x160xf32> to vector<16x32xf32>
    %7 = vector.extract_strided_slice %5 {offsets = [0, 32], sizes = [16, 32], strides = [1, 1]} : vector<16x160xf32> to vector<16x32xf32>
    %8 = vector.extract_strided_slice %5 {offsets = [0, 64], sizes = [16, 32], strides = [1, 1]} : vector<16x160xf32> to vector<16x32xf32>
    %9 = vector.extract_strided_slice %5 {offsets = [0, 96], sizes = [16, 32], strides = [1, 1]} : vector<16x160xf32> to vector<16x32xf32>
    %10 = vector.extract_strided_slice %5 {offsets = [0, 128], sizes = [16, 32], strides = [1, 1]} : vector<16x160xf32> to vector<16x32xf32>
    %c0_5 = arith.constant 0 : index
    %c0_6 = arith.constant 0 : index
    %11 = vector.load %arg4[%c0_5, %c0_6] : memref<16x32xf32, #tpu.memory_space<vmem>>, vector<16x32xf32>
    %c0_7 = arith.constant 0 : index
    %c0_8 = arith.constant 0 : index
    %12 = vector.load %arg5[%c0_7, %c0_8] : memref<16x32xf32, #tpu.memory_space<vmem>>, vector<16x32xf32>
    %13 = arith.mulf %6, %11 : vector<16x32xf32>
    %14 = arith.mulf %7, %12 : vector<16x32xf32>
    %15 = arith.addf %13, %14 : vector<16x32xf32>
    %16 = arith.truncf %15 : vector<16x32xf32> to vector<16x32xbf16>
    %c0_9 = arith.constant 0 : index
    %c0_10 = arith.constant 0 : index
    %17 = vector.load %arg6[%c0_9, %c0_10] : memref<16x32xbf16, #tpu.memory_space<vmem>>, vector<16x32xbf16>
    tpu.vector_store %arg6[%c0_9, %c0_10], %16 {strides = array<i32>} : memref<16x32xbf16, #tpu.memory_space<vmem>>, vector<16x32xbf16>,
    %18 = arith.mulf %8, %11 : vector<16x32xf32>
    %19 = arith.mulf %9, %12 : vector<16x32xf32>
    %20 = arith.addf %18, %19 : vector<16x32xf32>
    %21 = arith.truncf %20 : vector<16x32xf32> to vector<16x32xbf16>
    %c0_11 = arith.constant 0 : index
    %c0_12 = arith.constant 0 : index
    %22 = vector.load %arg7[%c0_11, %c0_12] : memref<16x64xbf16, #tpu.memory_space<vmem>>, vector<16x32xbf16>
    tpu.vector_store %arg7[%c0_11, %c0_12], %21 {strides = array<i32>} : memref<16x64xbf16, #tpu.memory_space<vmem>>, vector<16x32xbf16>,
    %23 = arith.truncf %10 : vector<16x32xf32> to vector<16x32xbf16>
    %c0_13 = arith.constant 0 : index
    %c32 = arith.constant 32 : index
    %24 = vector.load %arg7[%c0_13, %c32] : memref<16x64xbf16, #tpu.memory_space<vmem>>, vector<16x32xbf16>
    tpu.vector_store %arg7[%c0_13, %c32], %23 {strides = array<i32>} : memref<16x64xbf16, #tpu.memory_space<vmem>>, vector<16x32xbf16>,
    return
  }
  func.func @transform_0(%arg0: i32) -> (i32, i32) {
    %c0_i32 = arith.constant 0 : i32
    %c0_i32_0 = arith.constant 0 : i32
    return %arg0, %c0_i32 : i32, i32
  }
  func.func @transform_1(%arg0: i32) -> (i32, i32) {
    %c0_i32 = arith.constant 0 : i32
    %c0_i32_0 = arith.constant 0 : i32
    %c0_i32_1 = arith.constant 0 : i32
    return %c0_i32, %c0_i32_0 : i32, i32
  }
  func.func @transform_2(%arg0: i32) -> (i32, i32) {
    %c0_i32 = arith.constant 0 : i32
    %c0_i32_0 = arith.constant 0 : i32
    %c0_i32_1 = arith.constant 0 : i32
    return %c0_i32, %c0_i32_0 : i32, i32
  }
  func.func @transform_3(%arg0: i32) -> (i32, i32) {
    %c0_i32 = arith.constant 0 : i32
    %c0_i32_0 = arith.constant 0 : i32
    return %arg0, %c0_i32 : i32, i32
  }
  func.func @transform_4(%arg0: i32) -> (i32, i32) {
    %c0_i32 = arith.constant 0 : i32
    %c0_i32_0 = arith.constant 0 : i32
    return %arg0, %c0_i32 : i32, i32
  }
  func.func @transform_5(%arg0: i32) -> (i32, i32) {
    %c0_i32 = arith.constant 0 : i32
    %c0_i32_0 = arith.constant 0 : i32
    return %arg0, %c0_i32 : i32, i32
  }
  func.func @transform_6(%arg0: i32) -> (i32, i32) {
    %c0_i32 = arith.constant 0 : i32
    %c0_i32_0 = arith.constant 0 : i32
    return %arg0, %c0_i32 : i32, i32
  }
}

</mosaic_0001>

<llo_original>
// kernel: tpu_custom_call.1
$region0: #{tpu_custom_call.1}
  #allocation0 [shape = 'u32[]', space=smem, size = 0x4, offset = 0x4, fixed_abs, tag = 'smem constant byte address 0x4 - core index']
  #allocation1 [shape = 'u32[144,128]{1,0:T(1,128)}', space=vmem, size = 0x12000, scoped, tag = 'internal scratch']
  %s0 = inlined_call_operand.hbm [shape: f32[16,32], index: 0, kind: input, shape index: {}]
  %s1 = inlined_call_operand.hbm [shape: f32[32,160], index: 1, kind: input, shape index: {}]
  %s2 = inlined_call_operand.vmem [shape: f32[1,160], index: 2, kind: input, shape index: {}]
  %s3 = inlined_call_operand.hbm [shape: f32[16,32], index: 3, kind: input, shape index: {}]
  %s4 = inlined_call_operand.hbm [shape: f32[16,32], index: 4, kind: input, shape index: {}]
  %s5 = inlined_call_operand.hbm [shape: bf16[16,32], index: 5, kind: output, shape index: {0}]
  %s6 = inlined_call_operand.hbm [shape: bf16[16,64], index: 6, kind: output, shape index: {1}]
  %7 = xla_tuple %s5, %s6
  %s8 = sld [smem:[#allocation0]]
  $region54: #{tpu_custom_call.1} parent=0
    _
  %s10 = ssub.s32 1, %s8
  %s11 = scalar_select 0, %s10, %s8
  $region1: #{tpu_custom_call.1} parent=0
    #allocation2 [shape = 'u8[8192]{0}', space=vmem, size = 0x2000, scoped, tag = 'input window, operand 0, single buffered']
    #allocation3 [shape = 's32[1]{0}', space=sflag, size = 0x4, scoped, tag = 'scoped memory for tpu_custom_call.1']
    #allocation4 [shape = 's32[1]{0}', space=sflag, size = 0x4, scoped, tag = 'scoped memory for tpu_custom_call.1']
    #allocation5 [shape = 'u8[32768]{0}', space=vmem, size = 0x8000, scoped, tag = 'input window, operand 1, single buffered']
    #allocation6 [shape = 's32[1]{0}', space=sflag, size = 0x4, scoped, tag = 'scoped memory for tpu_custom_call.1']
    #allocation7 [shape = 'u8[8192]{0}', space=vmem, size = 0x2000, scoped, tag = 'input window, operand 3, single buffered']
    #allocation8 [shape = 'u8[8192]{0}', space=vmem, size = 0x2000, scoped, tag = 'input window, operand 4, single buffered']
    #allocation9 [shape = 's32[1]{0}', space=sflag, size = 0x4, scoped, tag = 'scoped memory for tpu_custom_call.1']
    #allocation10 [shape = 'u8[4096]{0}', space=vmem, size = 0x1000, scoped, tag = 'output window, operand 0, single buffered']
    #allocation11 [shape = 'u8[4096]{0}', space=vmem, size = 0x1000, scoped, tag = 'output window, operand 1, single buffered']
    #allocation12 [shape = 's32[1]{0}', space=sflag, size = 0x4, scoped, tag = 'scoped memory for tpu_custom_call.1']
    %12 = vsyncpa [#allocation3], 0
    %13 = vsyncpa [#allocation6], 0
    %14 = vsyncpa [#allocation9], 0
    %15 = vsyncpa [#allocation4], 0
    %16 = vsyncpa [#allocation12], 0
    // Predicated region
    $region2: #{tpu_custom_call.1} parent=1 // pred_check
      _
    $region3: #{tpu_custom_call.1} parent=1 // pred_check_branch
      %18 = sbr.rel (0) target = $region5
    $region4: #{tpu_custom_call.1} parent=1 // pred_region
      %s20 = ssub.s32 256, 256
      %21 = vsyncadd [#allocation3], %s20
      %s22 = sshll.u32 [#allocation2], 4
      %s23 = int_to_ptr.vmem [resolvable:$true] %s22
      %28 = dma.hbm_to_vmem [thread:$0]  %s0, 256, %s23, [#allocation3], 128, 128, 8
    $region5: #{tpu_custom_call.1} parent=1 // pred_fallthru
      _
    // Predicated region
    $region6: #{tpu_custom_call.1} parent=1 // pred_check
      _
    $region7: #{tpu_custom_call.1} parent=1 // pred_check_branch
      %30 = sbr.rel (0) target = $region9
    $region8: #{tpu_custom_call.1} parent=1 // pred_region
      %s32 = ssub.s32 1024, 1024
      %33 = vsyncadd [#allocation6], %s32
      %s34 = sshll.u32 [#allocation5], 4
      %s35 = int_to_ptr.vmem [resolvable:$true] %s34
      %40 = dma.hbm_to_vmem [thread:$0]  %s1, 1024, %s35, [#allocation6], 256, 256, 16
    $region9: #{tpu_custom_call.1} parent=1 // pred_fallthru
      _
    // Predicated region
    $region10: #{tpu_custom_call.1} parent=1 // pred_check
      _
    $region11: #{tpu_custom_call.1} parent=1 // pred_check_branch
      %42 = sbr.rel (0) target = $region13
    $region12: #{tpu_custom_call.1} parent=1 // pred_region
      _
    $region13: #{tpu_custom_call.1} parent=1 // pred_fallthru
      _
    // Predicated region
    $region14: #{tpu_custom_call.1} parent=1 // pred_check
      _
    $region15: #{tpu_custom_call.1} parent=1 // pred_check_branch
      %44 = sbr.rel (0) target = $region17
    $region16: #{tpu_custom_call.1} parent=1 // pred_region
      %s46 = ssub.s32 256, 256
      %47 = vsyncadd [#allocation6], %s46
      %s48 = sshll.u32 [#allocation7], 4
      %s49 = int_to_ptr.vmem [resolvable:$true] %s48
      %54 = dma.hbm_to_vmem [thread:$0]  %s3, 256, %s49, [#allocation6], 128, 128, 8
    $region17: #{tpu_custom_call.1} parent=1 // pred_fallthru
      _
    // Predicated region
    $region18: #{tpu_custom_call.1} parent=1 // pred_check
      _
    $region19: #{tpu_custom_call.1} parent=1 // pred_check_branch
      %56 = sbr.rel (0) target = $region21
    $region20: #{tpu_custom_call.1} parent=1 // pred_region
      %s58 = ssub.s32 256, 256
      %59 = vsyncadd [#allocation9], %s58
      %s60 = sshll.u32 [#allocation8], 4
      %s61 = int_to_ptr.vmem [resolvable:$true] %s60
      %66 = dma.hbm_to_vmem [thread:$0]  %s4, 256, %s61, [#allocation9], 128, 128, 8
    $region21: #{tpu_custom_call.1} parent=1 // pred_fallthru
      _
    // Predicated region
    $region22: #{tpu_custom_call.1} parent=1 // pred_check
      _
    $region23: #{tpu_custom_call.1} parent=1 // pred_check_branch
      %68 = sbr.rel (0) target = $region25
    $region24: #{tpu_custom_call.1} parent=1 // pred_region
      %69 = dma.done [#allocation3], 256
    $region25: #{tpu_custom_call.1} parent=1 // pred_fallthru
      _
    // Predicated region
    $region26: #{tpu_custom_call.1} parent=1 // pred_check
      _
    $region27: #{tpu_custom_call.1} parent=1 // pred_check_branch
      %71 = sbr.rel (0) target = $region29
    $region28: #{tpu_custom_call.1} parent=1 // pred_region
      %72 = dma.done [#allocation6], 1024
    $region29: #{tpu_custom_call.1} parent=1 // pred_fallthru
      _
    // Predicated region
    $region30: #{tpu_custom_call.1} parent=1 // pred_check
      _
    $region31: #{tpu_custom_call.1} parent=1 // pred_check_branch
      %74 = sbr.rel (0) target = $region33
    $region32: #{tpu_custom_call.1} parent=1 // pred_region
      %75 = dma.done [#allocation6], 256
    $region33: #{tpu_custom_call.1} parent=1 // pred_fallthru
      _
    // Predicated region
    $region34: #{tpu_custom_call.1} parent=1 // pred_check
      _
    $region35: #{tpu_custom_call.1} parent=1 // pred_check_branch
      %77 = sbr.rel (0) target = $region37
    $region36: #{tpu_custom_call.1} parent=1 // pred_region
      %78 = dma.done [#allocation9], 256
    $region37: #{tpu_custom_call.1} parent=1 // pred_fallthru
      _
    %v79 = vld [vmem:[#allocation2] sm:$0xff]
    %v80 = vld [vmem:[#allocation2 + $0x8] sm:$0xff]
    %v81 = vld [vmem:[#allocation5] sm:$0xff]
    %v82 = vld [vmem:[#allocation5 + $0x8] sm:$0xff]
    %v83 = vld [vmem:[#allocation5 + $0x10] sm:$0xff]
    %v84 = vld [vmem:[#allocation5 + $0x18] sm:$0xff]
    %v85 = vld [vmem:[#allocation5 + $0x20] sm:$0xff]
    %v86 = vld [vmem:[#allocation5 + $0x28] sm:$0xff]
    %v87 = vld [vmem:[#allocation5 + $0x30] sm:$0xff]
    %v88 = vld [vmem:[#allocation5 + $0x38] sm:$0xff]
    %v89 = vld [vmem:[%s2] sm:$0x3]
    %v91 = vlaneseq
    %v92 = vshrl.u32 %v91, 7
    %v93 = vsub.s32 0, %v92
    %v94 = vrot.slane %v89, %v93
    %v95 = vlaneseq
    %v96 = vshrl.u32 %v95, 7
    %v97 = vsub.s32 1, %v96
    %v98 = vrot.slane %v89, %v97
    %vm101 = vcmask 261120
    %v103 = vsel %vm101, %v79, 0
    %v106 = vsel %vm101, %v80, 0
    %108 = vmatprep.subr.mxu0 %v82
    %109 = vmatpush1.msra.mxu0 %v81
    %110 = vmatprep.subr.mxu0 %v84
    %111 = vmatpush1.msra.mxu0 %v83
    %112 = vmatprep.subr.mxu0 %v86
    %113 = vmatpush1.msra.mxu0 %v85
    %114 = vmatprep.subr.mxu0 %v88
    %115 = vmatpush1.msra.mxu0 %v87
    %116 = vmatprep.subr.mxu0 0.0
    %117 = vmatpush1.msra.mxu0 0.0
    %118 = vmatprep.subr.mxu0 0.0
    %119 = vmatpush1.msra.mxu0 0.0
    %120 = vmatprep.subr.mxu0 0.0
    %121 = vmatpush1.msra.mxu0 0.0
    %122 = vmatprep.subr.mxu0 0.0
    %123 = vmatpush1.msra.mxu0 0.0
    %124 = vmatprep.subr.mxu0 0.0
    %125 = vmatpush1.msra.mxu0 0.0
    %126 = vmatprep.subr.mxu0 0.0
    %127 = vmatpush1.msra.mxu0 0.0
    %128 = vmatprep.subr.mxu0 0.0
    %129 = vmatpush1.msra.mxu0 0.0
    %130 = vmatprep.subr.mxu0 0.0
    %131 = vmatpush1.msra.mxu0 0.0
    %132 = vmatprep.subr.mxu0 0.0
    %133 = vmatpush1.msra.mxu0 0.0
    %134 = vmatprep.subr.mxu0 0.0
    %135 = vmatpush1.msra.mxu0 0.0
    %136 = vmatprep.subr.mxu0 0.0
    %137 = vmatpush1.msra.mxu0 0.0
    %138 = vmatprep.subr.mxu0 0.0
    %139 = vmatpush1.msra.mxu0 0.0
    %140 = vmatprep.subr.mxu0 0.0
    %141 = vmatpush1.msra.mxu0 0.0
    %142 = vmatprep.subr.mxu0 0.0
    %143 = vmatpush1.msra.mxu0 0.0
    %144 = vmatprep.subr.mxu0 0.0
    %145 = vmatpush1.msra.mxu0 0.0
    %146 = vmatprep.subr.mxu0 0.0
    %147 = vmatpush1.msra.mxu0 0.0
    %148 = vmatprep.subr.mxu0 0.0
    %149 = vmatpush1.msra.mxu0 0.0
    %150 = vmatprep.subr.mxu0 0.0
    %151 = vmatpush1.msra.mxu0 0.0
    %152 = vmatprep.subr.mxu0 0.0
    %153 = vmatpush1.msra.mxu0 0.0
    %154 = vmatprep.subr.mxu0 0.0
    %155 = vmatpush1.msra.mxu0 0.0
    %156 = vmatprep.subr.mxu0 0.0
    %157 = vmatpush1.msra.mxu0 0.0
    %158 = vmatprep.subr.mxu0 0.0
    %159 = vmatpush1.msra.mxu0 0.0
    %160 = vmatprep.subr.mxu0 0.0
    %161 = vmatpush1.msra.mxu0 0.0
    %162 = vmatprep.subr.mxu0 0.0
    %163 = vmatpush1.msra.mxu0 0.0
    %164 = vmatprep.subr.mxu0 0.0
    %165 = vmatpush1.msra.mxu0 0.0
    %166 = vmatprep.subr.mxu0 0.0
    %167 = vmatpush1.msra.mxu0 0.0
    %168 = vmatprep.subr.mxu0 0.0
    %169 = vmatpush1.msra.mxu0 0.0
    %170 = vmatprep.subr.mxu0 0.0
    %171 = vmatpush1.msra.mxu0 0.0
    %172 = vmatprep.mubr.f32.mxu0 0.0
    %173 = vmatmul.mubr.f32.gmra.mrb[0].mxu0 %v103
    %v174 = vpop.f32.mrb[0].mxu0
    %v175 = vadd.f32 %v94, %v174
    %v176 = vpop.f32.mrb[0].mxu0
    %v177 = vadd.f32 %v98, %v176
    %178 = vmatprep.mubr.f32.mxu0 0.0
    %179 = vmatmul.mubr.f32.gmra.mrb[0].mxu0 %v106
    %v180 = vpop.f32.mrb[0].mxu0
    %v181 = vadd.f32 %v94, %v180
    %v182 = vpop.f32.mrb[0].mxu0
    %v183 = vadd.f32 %v98, %v182
    %184 = vdwg.mxu0
    %v185 = vld [vmem:[#allocation7] sm:$0xff]
    %v186 = vld [vmem:[#allocation7 + $0x8] sm:$0xff]
    %v187 = vld [vmem:[#allocation8] sm:$0xff]
    %v188 = vld [vmem:[#allocation8 + $0x8] sm:$0xff]
    %v189 = vmul.f32 %v175, %v185
    %v190 = vmul.f32 %v181, %v186
    %193 = vrot.lane.b32.xlu0 %v187, 32
    %v194 = vpop.permute.xlu0 %193
    %195 = vrot.lane.b32.xlu0 %v188, 32
    %v196 = vpop.permute.xlu0 %195
    %v199 = vmul.f32 %v175, %v194
    %v200 = vmul.f32 %v181, %v196
    %203 = vrot.lane.b32.xlu0 %v199, 96
    %v204 = vpop.permute.xlu0 %203
    %205 = vrot.lane.b32.xlu0 %v200, 96
    %v206 = vpop.permute.xlu0 %205
    %v209 = vadd.f32 %v189, %v204
    %v210 = vadd.f32 %v190, %v206
    %v211 = vpack.c.bf16 %v210, %v209
    %v213 = vunpack.c.l.b16 %v211
    %v214 = vunpack.c.h.b16 %v211
    %v215 = vpack.c.b16 %v213, %v213
    %v216 = vpack.c.b16 %v214, %v214
    %vm219 = vcmask 257024
    %220 = vst.msk [vmem:[#allocation10] sm:$0xf] %vm219, %v215
    %221 = vst.msk [vmem:[#allocation10 + $0x4] sm:$0xf] %vm219, %v216
    %224 = vrot.lane.b32.xlu0 %v185, 64
    %v225 = vpop.permute.xlu0 %224
    %226 = vrot.lane.b32.xlu0 %v186, 64
    %v227 = vpop.permute.xlu0 %226
    %v230 = vmul.f32 %v175, %v225
    %v231 = vmul.f32 %v181, %v227
    %232 = vrot.lane.b32.xlu0 %v187, 96
    %v233 = vpop.permute.xlu0 %232
    %234 = vrot.lane.b32.xlu0 %v188, 96
    %v235 = vpop.permute.xlu0 %234
    %v238 = vmul.f32 %v175, %v233
    %v239 = vmul.f32 %v181, %v235
    %242 = vrot.lane.b32.xlu0 %v238, 96
    %v243 = vpop.permute.xlu0 %242
    %244 = vrot.lane.b32.xlu0 %v239, 96
    %v245 = vpop.permute.xlu0 %244
    %v248 = vadd.f32 %v230, %v243
    %v249 = vadd.f32 %v231, %v245
    %v250 = vpack.c.bf16 %v249, %v248
    %v252 = vunpack.c.l.b16 %v250
    %v253 = vunpack.c.h.b16 %v250
    %v254 = vpack.c.b16 %v252, %v252
    %v255 = vpack.c.b16 %v253, %v253
    %256 = vrot.lane.b32.xlu0 %v254, 64
    %v257 = vpop.permute.xlu0 %256
    %258 = vrot.lane.b32.xlu0 %v255, 64
    %v259 = vpop.permute.xlu0 %258
    %262 = vst.msk [vmem:[#allocation11] sm:$0xf] %vm219, %v257
    %263 = vst.msk [vmem:[#allocation11 + $0x4] sm:$0xf] %vm219, %v259
    %v264 = vpack.c.bf16 %v183, %v177
    %v266 = vunpack.c.l.b16 %v264
    %v267 = vunpack.c.h.b16 %v264
    %v268 = vpack.c.b16 %v266, %v266
    %v269 = vpack.c.b16 %v267, %v267
    %270 = vrot.lane.b32.xlu0 %v268, 32
    %v271 = vpop.permute.xlu0 %270
    %272 = vrot.lane.b32.xlu0 %v269, 32
    %v273 = vpop.permute.xlu0 %272
    %vm276 = vcmask 519424
    %277 = vst.msk [vmem:[#allocation11] sm:$0xf] %vm276, %v271
    %278 = vst.msk [vmem:[#allocation11 + $0x4] sm:$0xf] %vm276, %v273
    // Predicated region
    $region38: #{tpu_custom_call.1} parent=1 // pred_check
      _
    $region39: #{tpu_custom_call.1} parent=1 // pred_check_branch
      %280 = sbr.rel (0) target = $region41
    $region40: #{tpu_custom_call.1} parent=1 // pred_region
      %s282 = ssub.s32 128, 128
      %283 = vsyncadd [#allocation4], %s282
      %s284 = sshll.u32 [#allocation10], 4
      %s285 = int_to_ptr.vmem [resolvable:$true] %s284
      %290 = dma.vmem_to_hbm [thread:$0]  %s285, 128, %s5, [#allocation4], 64, 64, 4
    $region41: #{tpu_custom_call.1} parent=1 // pred_fallthru
      _
    // Predicated region
    $region42: #{tpu_custom_call.1} parent=1 // pred_check
      _
    $region43: #{tpu_custom_call.1} parent=1 // pred_check_branch
      %292 = sbr.rel (0) target = $region45
    $region44: #{tpu_custom_call.1} parent=1 // pred_region
      %s294 = ssub.s32 128, 128
      %295 = vsyncadd [#allocation12], %s294
      %s296 = sshll.u32 [#allocation11], 4
      %s297 = int_to_ptr.vmem [resolvable:$true] %s296
      %302 = dma.vmem_to_hbm [thread:$0]  %s297, 128, %s6, [#allocation12], 64, 64, 4
    $region45: #{tpu_custom_call.1} parent=1 // pred_fallthru
      _
    // Predicated region
    $region46: #{tpu_custom_call.1} parent=1 // pred_check
      _
    $region47: #{tpu_custom_call.1} parent=1 // pred_check_branch
      %304 = sbr.rel (0) target = $region49
    $region48: #{tpu_custom_call.1} parent=1 // pred_region
      %305 = dma.done [#allocation4], 128
    $region49: #{tpu_custom_call.1} parent=1 // pred_fallthru
      _
    // Predicated region
    $region50: #{tpu_custom_call.1} parent=1 // pred_check
      _
    $region51: #{tpu_custom_call.1} parent=1 // pred_check_branch
      %307 = sbr.rel (0) target = $region53
    $region52: #{tpu_custom_call.1} parent=1 // pred_region
      %308 = dma.done [#allocation12], 128
    $region53: #{tpu_custom_call.1} parent=1 // pred_fallthru
      _
    %309 = vsyncpa [#allocation3], 1
    %310 = vsyncpa [#allocation6], 1
    %311 = vsyncpa [#allocation9], 1
    %312 = vsyncpa [#allocation4], 1
    %313 = vsyncpa [#allocation12], 1

</llo_original>
